<compile_context>
chip_gen: v7x
topology: tpu7x:2x2x1
jax: 0.10.0
libtpu: 0.0.40
codegen_flags: <defaults>
</compile_context>

<pallas_src>
import jax
import jax.numpy as jnp
from jax import lax
from jax.experimental import pallas as pl
from jax.experimental.pallas import tpu as pltpu


def _round_up(v, m):
    return (v + m - 1) // m * m


def _make_sbb_kernel(H, W, n_chunk):
    """Kernel over a (C, L) slab with L = n_chunk * H * W lanes."""
    HW = H * W
    L = n_chunk * HW

    def kernel(x_ref, w1_ref, b1_ref, w2_ref, b2_ref, w3_ref, b3_ref,
               w4_ref, b4_ref, o_ref):
        # x_ref: (1, Cin_p, L) bf16     o_ref: (1, Cout_p, L) f32
        # w1: (Cm_p, Cin_p) bf16        w4: (Cout_p, Cm_p) bf16
        # w2/w3: (3, Cm_p, Cm_p) bf16   taps ordered [-1, 0, +1]
        # b*: (C_p, 1) f32
        x = x_ref[0]                                          # (Cin_p, L) bf16

        # Image-local flat index / column index along the lane axis
        # (2-D iota required on TPU).
        idx = lax.broadcasted_iota(jnp.int32, (1, L), 1)
        li = idx % HW                                         # local h*W + w
        col = li % W                                          # local w

        def mxu(w_bf16, a_f32):
            # bf16 MXU feed, f32 accumulate.
            return jnp.dot(w_bf16, a_f32.astype(jnp.bfloat16),
                           preferred_element_type=jnp.float32)

        # --- conv1: 1x1 + ReLU (x is already bf16; no in-kernel cast) ----
        y1 = jnp.maximum(
            jnp.dot(w1_ref[...], x, preferred_element_type=jnp.float32)
            + b1_ref[...], 0.0)                               # (Cm_p, L) f32

        # --- conv2: (3,1), pad (1,0) + ReLU ------------------------------
        # Taps over H <=> +-W shifts of the flattened spatial axis (XLU roll),
        # zero-padded at the image edges via the li masks.  Three accumulating
        # dots replace the previous 3*Cm concat.
        up = jnp.where(li >= W, pltpu.roll(y1, W, axis=1), 0.0)        # y1[h-1]
        dn = jnp.where(li < HW - W, pltpu.roll(y1, L - W, axis=1), 0.0)  # y1[h+1]
        acc2 = mxu(w2_ref[0], up)
        acc2 = acc2 + mxu(w2_ref[1], y1)
        acc2 = acc2 + mxu(w2_ref[2], dn)
        y2 = jnp.maximum(acc2 + b2_ref[...], 0.0)             # (Cm_p, L) f32

        # --- conv3: (1,3), pad (0,1) + ReLU ------------------------------
        lf = jnp.where(col >= 1, pltpu.roll(y2, 1, axis=1), 0.0)        # y2[w-1]
        rt = jnp.where(col <= W - 2, pltpu.roll(y2, L - 1, axis=1), 0.0)  # y2[w+1]
        acc3 = mxu(w3_ref[0], lf)
        acc3 = acc3 + mxu(w3_ref[1], y2)
        acc3 = acc3 + mxu(w3_ref[2], rt)
        y3 = jnp.maximum(acc3 + b3_ref[...], 0.0)             # (Cm_p, L) f32

        # --- conv4: 1x1 (no activation) ----------------------------------
        o_ref[0] = (mxu(w4_ref[...], y3) + b4_ref[...]).astype(o_ref.dtype)

    return kernel


def small_basic_block_pallas(x_nchw, params, images_per_step=None):
    """x_nchw: (N, Cin, H, W) float32 -> (N, Cout, H, W) float32."""
    w1, b1, w2, b2, w3, b3, w4, b4 = params
    N, Cin, H, W = x_nchw.shape
    Cm = w1.shape[0]
    Cout = w4.shape[0]
    HW = H * W

    # Sublane-align every channel dimension (f32 activations -> multiple of 8).
    Cin_p = _round_up(Cin, 8)
    Cm_p = _round_up(Cm, 8)
    Cout_p = _round_up(Cout, 8)

    # Batch folding: pack n_chunk images on the lane axis per grid step, but
    # keep >= 2 grid steps when N allows (2 TensorCores on v7x).
    if images_per_step is None:
        divisors = [c for c in range(1, N + 1) if N % c == 0]
        folded = [c for c in divisors if N // c >= 2]
        images_per_step = max(folded) if folded else N
    n_chunk = images_per_step
    assert N % n_chunk == 0
    G = N // n_chunk
    L = n_chunk * HW

    # ---- weight packing: pad to aligned shapes, pre-cast to bf16 ----------
    def pad2(a, r, c):
        return jnp.zeros((r, c), a.dtype).at[:a.shape[0], :a.shape[1]].set(a)

    def pad_taps(w_flat):
        # (Cm, 3*Cm) tap-blocked [-1, 0, +1] -> (3, Cm_p, Cm_p)
        out = jnp.zeros((3, Cm_p, Cm_p), w_flat.dtype)
        for t in range(3):
            out = out.at[t, :Cm, :Cm].set(w_flat[:, t * Cm:(t + 1) * Cm])
        return out

    w1_p = pad2(w1, Cm_p, Cin_p).astype(jnp.bfloat16)
    w2_p = pad_taps(w2).astype(jnp.bfloat16)
    w3_p = pad_taps(w3).astype(jnp.bfloat16)
    w4_p = pad2(w4, Cout_p, Cm_p).astype(jnp.bfloat16)
    b1_p = pad2(b1, Cm_p, 1)
    b2_p = pad2(b2, Cm_p, 1)
    b3_p = pad2(b3, Cm_p, 1)
    b4_p = pad2(b4, Cout_p, 1)

    # ---- input packing: pad channels, fold batch chunk into lanes, bf16 ---
    x = x_nchw.reshape(N, Cin, HW)
    if Cin_p != Cin:
        x = jnp.pad(x, ((0, 0), (0, Cin_p - Cin), (0, 0)))
    x = (x.reshape(G, n_chunk, Cin_p, HW)
           .transpose(0, 2, 1, 3)
           .reshape(G, Cin_p, L)
           .astype(jnp.bfloat16))

    full = lambda a: pl.BlockSpec(a.shape, lambda g: (0,) * a.ndim)

    out = pl.pallas_call(
        _make_sbb_kernel(H, W, n_chunk),
        out_shape=jax.ShapeDtypeStruct((G, Cout_p, L), jnp.float32),
        grid_spec=pltpu.PrefetchScalarGridSpec(
            num_scalar_prefetch=0,
            grid=(G,),
            in_specs=[
                pl.BlockSpec((1, Cin_p, L), lambda g: (g, 0, 0)),
                full(w1_p), full(b1_p), full(w2_p), full(b2_p),
                full(w3_p), full(b3_p), full(w4_p), full(b4_p),
            ],
            out_specs=pl.BlockSpec((1, Cout_p, L), lambda g: (g, 0, 0)),
        ),
        compiler_params=pltpu.CompilerParams(
            dimension_semantics=("parallel",),
            vmem_limit_bytes=32 * 1024 * 1024),
    )(x, w1_p, b1_p, w2_p, b2_p, w3_p, b3_p, w4_p, b4_p)

    # Unfold lanes -> images, drop channel padding, restore (N, Cout, H, W).
    out = (out.reshape(G, Cout_p, n_chunk, HW)
              .transpose(0, 2, 1, 3)
              .reshape(N, Cout_p, HW)[:, :Cout]
              .reshape(N, Cout, H, W))
    return out


def init_params(key, ch_in, ch_out):
    """Deterministic synthetic weights in flipped matmul form:
         w1: (Cm, Cin)      b1: (Cm, 1)
         w2: (Cm, 3*Cm)     b2: (Cm, 1)   taps ordered [h-1, h, h+1]
         w3: (Cm, 3*Cm)     b3: (Cm, 1)   taps ordered [w-1, w, w+1]
         w4: (Cout, Cm)     b4: (Cout, 1)
    """
    cm = ch_out // 4
    ks = jax.random.split(key, 8)
    s = 0.1
    w1 = s * jax.random.normal(ks[0], (cm, ch_in), jnp.float32)
    b1 = s * jax.random.normal(ks[1], (cm, 1), jnp.float32)
    w2 = s * jax.random.normal(ks[2], (cm, 3 * cm), jnp.float32)
    b2 = s * jax.random.normal(ks[3], (cm, 1), jnp.float32)
    w3 = s * jax.random.normal(ks[4], (cm, 3 * cm), jnp.float32)
    b3 = s * jax.random.normal(ks[5], (cm, 1), jnp.float32)
    w4 = s * jax.random.normal(ks[6], (ch_out, cm), jnp.float32)
    b4 = s * jax.random.normal(ks[7], (ch_out, 1), jnp.float32)
    return (w1, b1, w2, b2, w3, b3, w4, b4)


def small_basic_block_ref(x_nchw, params):
    """Plain-JAX reference (lax.conv) with identical semantics."""
    w1, b1, w2, b2, w3, b3, w4, b4 = params
    cm = w1.shape[0]

    def conv(x, w_oihw, b, pad):
        y = lax.conv_general_dilated(
            x, w_oihw, window_strides=(1, 1), padding=pad,
            dimension_numbers=("NCHW", "OIHW", "NCHW"))
        return y + b.reshape(1, -1, 1, 1)

    # Rebuild OIHW conv weights from the matmul-form params.
    w1_o = w1[:, :, None, None]                                            # (Cm,Cin,1,1)
    w2_o = jnp.transpose(w2.reshape(cm, 3, cm), (0, 2, 1))[:, :, :, None]  # (Cm,Cm,3,1)
    w3_o = jnp.transpose(w3.reshape(cm, 3, cm), (0, 2, 1))[:, :, None, :]  # (Cm,Cm,1,3)
    w4_o = w4[:, :, None, None]                                            # (Cout,Cm,1,1)

    y = jax.nn.relu(conv(x_nchw, w1_o, b1, [(0, 0), (0, 0)]))
    y = jax.nn.relu(conv(y, w2_o, b2, [(1, 1), (0, 0)]))
    y = jax.nn.relu(conv(y, w3_o, b3, [(0, 0), (1, 1)]))
    y = conv(y, w4_o, b4, [(0, 0), (0, 0)])
    return y


if __name__ == "__main__":
    key = jax.random.PRNGKey(0)
    kx, kp = jax.random.split(key)

    N, CH_IN, CH_OUT, H, W = 2, 4, 16, 16, 16
    x = jax.random.normal(kx, (N, CH_IN, H, W), jnp.float32)   # NCHW like PyTorch
    params = init_params(kp, CH_IN, CH_OUT)

    out = jax.block_until_ready(small_basic_block_pallas(x, params))
    ref = jax.block_until_ready(small_basic_block_ref(x, params))

    assert out.shape == (N, CH_OUT, H, W)
    # bf16 MXU feeds with f32 accumulation -> loosened tolerance vs f32 ref.
    assert jnp.allclose(out, ref, atol=2e-2, rtol=2e-2), "mismatch vs reference"

    print("KERNEL_OK")
</pallas_src>

<mosaic_0001>
module attributes {stable_mosaic.version = 11 : i64} {
  func.func @kernel(%arg0: i32, %arg1: memref<1x8x256xbf16, #tpu.memory_space<vmem>>, %arg2: memref<8x8xbf16, #tpu.memory_space<vmem>>, %arg3: memref<8x1xf32, #tpu.memory_space<vmem>>, %arg4: memref<3x8x8xbf16, #tpu.memory_space<vmem>>, %arg5: memref<8x1xf32, #tpu.memory_space<vmem>>, %arg6: memref<3x8x8xbf16, #tpu.memory_space<vmem>>, %arg7: memref<8x1xf32, #tpu.memory_space<vmem>>, %arg8: memref<16x8xbf16, #tpu.memory_space<vmem>>, %arg9: memref<16x1xf32, #tpu.memory_space<vmem>>, %arg10: memref<1x16x256xf32, #tpu.memory_space<vmem>>) attributes {dimension_semantics = [#tpu.dimension_semantics<parallel>], iteration_bounds = array<i64: 2>, scalar_prefetch = 0 : i64, scratch_operands = 0 : i64, tpu.core_type = #tpu.core_type<tc>, window_params = [{transform_indices = @transform_0, window_bounds = array<i64: 1, 8, 256>}, {pipeline_mode = #tpu.pipeline_mode<synchronous>, transform_indices = @transform_1, window_bounds = array<i64: 8, 8>}, {pipeline_mode = #tpu.pipeline_mode<synchronous>, transform_indices = @transform_2, window_bounds = array<i64: 8, 1>}, {pipeline_mode = #tpu.pipeline_mode<synchronous>, transform_indices = @transform_3, window_bounds = array<i64: 3, 8, 8>}, {pipeline_mode = #tpu.pipeline_mode<synchronous>, transform_indices = @transform_4, window_bounds = array<i64: 8, 1>}, {pipeline_mode = #tpu.pipeline_mode<synchronous>, transform_indices = @transform_5, window_bounds = array<i64: 3, 8, 8>}, {pipeline_mode = #tpu.pipeline_mode<synchronous>, transform_indices = @transform_6, window_bounds = array<i64: 8, 1>}, {pipeline_mode = #tpu.pipeline_mode<synchronous>, transform_indices = @transform_7, window_bounds = array<i64: 16, 8>}, {pipeline_mode = #tpu.pipeline_mode<synchronous>, transform_indices = @transform_8, window_bounds = array<i64: 16, 1>}, {transform_indices = @transform_9, window_bounds = array<i64: 1, 16, 256>}]} {
    %c0 = arith.constant 0 : index
    %c0_0 = arith.constant 0 : index
    %c0_1 = arith.constant 0 : index
    %0 = vector.load %arg1[%c0, %c0_0, %c0_1] : memref<1x8x256xbf16, #tpu.memory_space<vmem>>, vector<1x8x256xbf16>
    %1 = vector.shape_cast %0 : vector<1x8x256xbf16> to vector<8x256xbf16>
    %2 = tpu.iota {dimensions = array<i32: 1>} : vector<1x256xi32>
    %c256_i32 = arith.constant 256 : i32
    %c0_i32 = arith.constant 0 : i32
    %3 = arith.cmpi eq, %c256_i32, %c0_i32 : i32
    %c1_i32 = arith.constant 1 : i32
    %4 = arith.select %3, %c1_i32, %c256_i32 : i32
    %5 = vector.broadcast %4 : i32 to vector<1x256xi32>
    %6 = arith.remsi %2, %5 : vector<1x256xi32>
    %c0_i32_2 = arith.constant 0 : i32
    %7 = vector.broadcast %c0_i32_2 : i32 to vector<1x256xi32>
    %8 = arith.cmpi ne, %6, %7 : vector<1x256xi32>
    %c0_i32_3 = arith.constant 0 : i32
    %9 = vector.broadcast %c0_i32_3 : i32 to vector<1x256xi32>
    %10 = arith.cmpi slt, %6, %9 : vector<1x256xi32>
    %c0_i32_4 = arith.constant 0 : i32
    %11 = arith.cmpi slt, %4, %c0_i32_4 : i32
    %12 = vector.broadcast %11 : i1 to vector<1x256xi1>
    %13 = vector.broadcast %12 : vector<1x256xi1> to vector<1x256xi1>
    %14 = arith.xori %10, %13 : vector<1x256xi1>
    %15 = arith.andi %14, %8 : vector<1x256xi1>
    %16 = vector.broadcast %4 : i32 to vector<1x256xi32>
    %17 = arith.addi %6, %16 : vector<1x256xi32>
    %18 = arith.select %15, %17, %6 : vector<1x256xi1>, vector<1x256xi32>
    %c16_i32 = arith.constant 16 : i32
    %c0_i32_5 = arith.constant 0 : i32
    %19 = arith.cmpi eq, %c16_i32, %c0_i32_5 : i32
    %c1_i32_6 = arith.constant 1 : i32
    %20 = arith.select %19, %c1_i32_6, %c16_i32 : i32
    %21 = vector.broadcast %20 : i32 to vector<1x256xi32>
    %22 = arith.remsi %18, %21 : vector<1x256xi32>
    %c0_i32_7 = arith.constant 0 : i32
    %23 = vector.broadcast %c0_i32_7 : i32 to vector<1x256xi32>
    %24 = arith.cmpi ne, %22, %23 : vector<1x256xi32>
    %c0_i32_8 = arith.constant 0 : i32
    %25 = vector.broadcast %c0_i32_8 : i32 to vector<1x256xi32>
    %26 = arith.cmpi slt, %22, %25 : vector<1x256xi32>
    %c0_i32_9 = arith.constant 0 : i32
    %27 = arith.cmpi slt, %20, %c0_i32_9 : i32
    %28 = vector.broadcast %27 : i1 to vector<1x256xi1>
    %29 = vector.broadcast %28 : vector<1x256xi1> to vector<1x256xi1>
    %30 = arith.xori %26, %29 : vector<1x256xi1>
    %31 = arith.andi %30, %24 : vector<1x256xi1>
    %32 = vector.broadcast %20 : i32 to vector<1x256xi32>
    %33 = arith.addi %22, %32 : vector<1x256xi32>
    %34 = arith.select %31, %33, %22 : vector<1x256xi1>, vector<1x256xi32>
    %c0_10 = arith.constant 0 : index
    %c0_11 = arith.constant 0 : index
    %35 = vector.load %arg2[%c0_10, %c0_11] : memref<8x8xbf16, #tpu.memory_space<vmem>>, vector<8x8xbf16>
    %cst = arith.constant dense<0.000000e+00> : vector<8x256xf32>
    %36 = tpu.matmul %35, %1, %cst {dimension_numbers = #tpu.dot_dimension_numbers<[1], [0], [0], [1], [0, 0, 1, 1], [], []>} : vector<8x8xbf16>, vector<8x256xbf16>, vector<8x256xf32> -> vector<8x256xf32>
    %c0_12 = arith.constant 0 : index
    %c0_13 = arith.constant 0 : index
    %37 = vector.load %arg3[%c0_12, %c0_13] : memref<8x1xf32, #tpu.memory_space<vmem>>, vector<8x1xf32>
    %38 = vector.broadcast %37 : vector<8x1xf32> to vector<8x256xf32>
    %39 = arith.addf %36, %38 : vector<8x256xf32>
    %cst_14 = arith.constant 0.000000e+00 : f32
    %40 = vector.broadcast %cst_14 : f32 to vector<8x256xf32>
    %41 = arith.maximumf %39, %40 : vector<8x256xf32>
    %c16_i32_15 = arith.constant 16 : i32
    %42 = vector.broadcast %c16_i32_15 : i32 to vector<1x256xi32>
    %43 = arith.cmpi sge, %18, %42 : vector<1x256xi32>
    %c16_i32_16 = arith.constant 16 : i32
    %44 = tpu.dynamic_rotate %41 by %c16_i32_16 dim 1 : vector<8x256xf32>, i32 -> vector<8x256xf32>
    %cst_17 = arith.constant 0.000000e+00 : f32
    %45 = vector.shape_cast %43 : vector<1x256xi1> to vector<1x256xi1>
    %46 = vector.broadcast %45 : vector<1x256xi1> to vector<8x256xi1>
    %47 = vector.broadcast %cst_17 : f32 to vector<8x256xf32>
    %48 = arith.select %46, %44, %47 : vector<8x256xi1>, vector<8x256xf32>
    %c240_i32 = arith.constant 240 : i32
    %49 = vector.broadcast %c240_i32 : i32 to vector<1x256xi32>
    %50 = arith.cmpi slt, %18, %49 : vector<1x256xi32>
    %c240_i32_18 = arith.constant 240 : i32
    %51 = tpu.dynamic_rotate %41 by %c240_i32_18 dim 1 : vector<8x256xf32>, i32 -> vector<8x256xf32>
    %cst_19 = arith.constant 0.000000e+00 : f32
    %52 = vector.shape_cast %50 : vector<1x256xi1> to vector<1x256xi1>
    %53 = vector.broadcast %52 : vector<1x256xi1> to vector<8x256xi1>
    %54 = vector.broadcast %cst_19 : f32 to vector<8x256xf32>
    %55 = arith.select %53, %51, %54 : vector<8x256xi1>, vector<8x256xf32>
    %c0_20 = arith.constant 0 : index
    %c0_21 = arith.constant 0 : index
    %c0_22 = arith.constant 0 : index
    %56 = vector.load %arg4[%c0_20, %c0_21, %c0_22] : memref<3x8x8xbf16, #tpu.memory_space<vmem>>, vector<1x8x8xbf16>
    %57 = vector.shape_cast %56 : vector<1x8x8xbf16> to vector<8x8xbf16>
    %58 = arith.truncf %48 : vector<8x256xf32> to vector<8x256xbf16>
    %cst_23 = arith.constant dense<0.000000e+00> : vector<8x256xf32>
    %59 = tpu.matmul %57, %58, %cst_23 {dimension_numbers = #tpu.dot_dimension_numbers<[1], [0], [0], [1], [0, 0, 1, 1], [], []>} : vector<8x8xbf16>, vector<8x256xbf16>, vector<8x256xf32> -> vector<8x256xf32>
    %c1 = arith.constant 1 : index
    %c0_24 = arith.constant 0 : index
    %c0_25 = arith.constant 0 : index
    %60 = vector.load %arg4[%c1, %c0_24, %c0_25] : memref<3x8x8xbf16, #tpu.memory_space<vmem>>, vector<1x8x8xbf16>
    %61 = vector.shape_cast %60 : vector<1x8x8xbf16> to vector<8x8xbf16>
    %62 = arith.truncf %41 : vector<8x256xf32> to vector<8x256xbf16>
    %cst_26 = arith.constant dense<0.000000e+00> : vector<8x256xf32>
    %63 = tpu.matmul %61, %62, %cst_26 {dimension_numbers = #tpu.dot_dimension_numbers<[1], [0], [0], [1], [0, 0, 1, 1], [], []>} : vector<8x8xbf16>, vector<8x256xbf16>, vector<8x256xf32> -> vector<8x256xf32>
    %64 = arith.addf %59, %63 : vector<8x256xf32>
    %c2 = arith.constant 2 : index
    %c0_27 = arith.constant 0 : index
    %c0_28 = arith.constant 0 : index
    %65 = vector.load %arg4[%c2, %c0_27, %c0_28] : memref<3x8x8xbf16, #tpu.memory_space<vmem>>, vector<1x8x8xbf16>
    %66 = vector.shape_cast %65 : vector<1x8x8xbf16> to vector<8x8xbf16>
    %67 = arith.truncf %55 : vector<8x256xf32> to vector<8x256xbf16>
    %cst_29 = arith.constant dense<0.000000e+00> : vector<8x256xf32>
    %68 = tpu.matmul %66, %67, %cst_29 {dimension_numbers = #tpu.dot_dimension_numbers<[1], [0], [0], [1], [0, 0, 1, 1], [], []>} : vector<8x8xbf16>, vector<8x256xbf16>, vector<8x256xf32> -> vector<8x256xf32>
    %69 = arith.addf %64, %68 : vector<8x256xf32>
    %c0_30 = arith.constant 0 : index
    %c0_31 = arith.constant 0 : index
    %70 = vector.load %arg5[%c0_30, %c0_31] : memref<8x1xf32, #tpu.memory_space<vmem>>, vector<8x1xf32>
    %71 = vector.broadcast %70 : vector<8x1xf32> to vector<8x256xf32>
    %72 = arith.addf %69, %71 : vector<8x256xf32>
    %cst_32 = arith.constant 0.000000e+00 : f32
    %73 = vector.broadcast %cst_32 : f32 to vector<8x256xf32>
    %74 = arith.maximumf %72, %73 : vector<8x256xf32>
    %c1_i32_33 = arith.constant 1 : i32
    %75 = vector.broadcast %c1_i32_33 : i32 to vector<1x256xi32>
    %76 = arith.cmpi sge, %34, %75 : vector<1x256xi32>
    %c1_i32_34 = arith.constant 1 : i32
    %77 = tpu.dynamic_rotate %74 by %c1_i32_34 dim 1 : vector<8x256xf32>, i32 -> vector<8x256xf32>
    %cst_35 = arith.constant 0.000000e+00 : f32
    %78 = vector.shape_cast %76 : vector<1x256xi1> to vector<1x256xi1>
    %79 = vector.broadcast %78 : vector<1x256xi1> to vector<8x256xi1>
    %80 = vector.broadcast %cst_35 : f32 to vector<8x256xf32>
    %81 = arith.select %79, %77, %80 : vector<8x256xi1>, vector<8x256xf32>
    %c14_i32 = arith.constant 14 : i32
    %82 = vector.broadcast %c14_i32 : i32 to vector<1x256xi32>
    %83 = arith.cmpi sle, %34, %82 : vector<1x256xi32>
    %c255_i32 = arith.constant 255 : i32
    %84 = tpu.dynamic_rotate %74 by %c255_i32 dim 1 : vector<8x256xf32>, i32 -> vector<8x256xf32>
    %cst_36 = arith.constant 0.000000e+00 : f32
    %85 = vector.shape_cast %83 : vector<1x256xi1> to vector<1x256xi1>
    %86 = vector.broadcast %85 : vector<1x256xi1> to vector<8x256xi1>
    %87 = vector.broadcast %cst_36 : f32 to vector<8x256xf32>
    %88 = arith.select %86, %84, %87 : vector<8x256xi1>, vector<8x256xf32>
    %c0_37 = arith.constant 0 : index
    %c0_38 = arith.constant 0 : index
    %c0_39 = arith.constant 0 : index
    %89 = vector.load %arg6[%c0_37, %c0_38, %c0_39] : memref<3x8x8xbf16, #tpu.memory_space<vmem>>, vector<1x8x8xbf16>
    %90 = vector.shape_cast %89 : vector<1x8x8xbf16> to vector<8x8xbf16>
    %91 = arith.truncf %81 : vector<8x256xf32> to vector<8x256xbf16>
    %cst_40 = arith.constant dense<0.000000e+00> : vector<8x256xf32>
    %92 = tpu.matmul %90, %91, %cst_40 {dimension_numbers = #tpu.dot_dimension_numbers<[1], [0], [0], [1], [0, 0, 1, 1], [], []>} : vector<8x8xbf16>, vector<8x256xbf16>, vector<8x256xf32> -> vector<8x256xf32>
    %c1_41 = arith.constant 1 : index
    %c0_42 = arith.constant 0 : index
    %c0_43 = arith.constant 0 : index
    %93 = vector.load %arg6[%c1_41, %c0_42, %c0_43] : memref<3x8x8xbf16, #tpu.memory_space<vmem>>, vector<1x8x8xbf16>
    %94 = vector.shape_cast %93 : vector<1x8x8xbf16> to vector<8x8xbf16>
    %95 = arith.truncf %74 : vector<8x256xf32> to vector<8x256xbf16>
    %cst_44 = arith.constant dense<0.000000e+00> : vector<8x256xf32>
    %96 = tpu.matmul %94, %95, %cst_44 {dimension_numbers = #tpu.dot_dimension_numbers<[1], [0], [0], [1], [0, 0, 1, 1], [], []>} : vector<8x8xbf16>, vector<8x256xbf16>, vector<8x256xf32> -> vector<8x256xf32>
    %97 = arith.addf %92, %96 : vector<8x256xf32>
    %c2_45 = arith.constant 2 : index
    %c0_46 = arith.constant 0 : index
    %c0_47 = arith.constant 0 : index
    %98 = vector.load %arg6[%c2_45, %c0_46, %c0_47] : memref<3x8x8xbf16, #tpu.memory_space<vmem>>, vector<1x8x8xbf16>
    %99 = vector.shape_cast %98 : vector<1x8x8xbf16> to vector<8x8xbf16>
    %100 = arith.truncf %88 : vector<8x256xf32> to vector<8x256xbf16>
    %cst_48 = arith.constant dense<0.000000e+00> : vector<8x256xf32>
    %101 = tpu.matmul %99, %100, %cst_48 {dimension_numbers = #tpu.dot_dimension_numbers<[1], [0], [0], [1], [0, 0, 1, 1], [], []>} : vector<8x8xbf16>, vector<8x256xbf16>, vector<8x256xf32> -> vector<8x256xf32>
    %102 = arith.addf %97, %101 : vector<8x256xf32>
    %c0_49 = arith.constant 0 : index
    %c0_50 = arith.constant 0 : index
    %103 = vector.load %arg7[%c0_49, %c0_50] : memref<8x1xf32, #tpu.memory_space<vmem>>, vector<8x1xf32>
    %104 = vector.broadcast %103 : vector<8x1xf32> to vector<8x256xf32>
    %105 = arith.addf %102, %104 : vector<8x256xf32>
    %cst_51 = arith.constant 0.000000e+00 : f32
    %106 = vector.broadcast %cst_51 : f32 to vector<8x256xf32>
    %107 = arith.maximumf %105, %106 : vector<8x256xf32>
    %c0_52 = arith.constant 0 : index
    %c0_53 = arith.constant 0 : index
    %108 = vector.load %arg8[%c0_52, %c0_53] : memref<16x8xbf16, #tpu.memory_space<vmem>>, vector<16x8xbf16>
    %109 = arith.truncf %107 : vector<8x256xf32> to vector<8x256xbf16>
    %cst_54 = arith.constant dense<0.000000e+00> : vector<16x256xf32>
    %110 = tpu.matmul %108, %109, %cst_54 {dimension_numbers = #tpu.dot_dimension_numbers<[1], [0], [0], [1], [0, 0, 1, 1], [], []>} : vector<16x8xbf16>, vector<8x256xbf16>, vector<16x256xf32> -> vector<16x256xf32>
    %c0_55 = arith.constant 0 : index
    %c0_56 = arith.constant 0 : index
    %111 = vector.load %arg9[%c0_55, %c0_56] : memref<16x1xf32, #tpu.memory_space<vmem>>, vector<16x1xf32>
    %112 = vector.broadcast %111 : vector<16x1xf32> to vector<16x256xf32>
    %113 = arith.addf %110, %112 : vector<16x256xf32>
    %c0_57 = arith.constant 0 : index
    %c0_58 = arith.constant 0 : index
    %c0_59 = arith.constant 0 : index
    %114 = vector.load %arg10[%c0_57, %c0_58, %c0_59] : memref<1x16x256xf32, #tpu.memory_space<vmem>>, vector<1x16x256xf32>
    %115 = vector.shape_cast %114 : vector<1x16x256xf32> to vector<16x256xf32>
    %116 = vector.shape_cast %113 : vector<16x256xf32> to vector<1x16x256xf32>
    tpu.vector_store %arg10[%c0_57, %c0_58, %c0_59], %116 {strides = array<i32>} : memref<1x16x256xf32, #tpu.memory_space<vmem>>, vector<1x16x256xf32>,
    return
  }
  func.func @transform_0(%arg0: i32) -> (i32, i32, i32) {
    %c0_i32 = arith.constant 0 : i32
    %c0_i32_0 = arith.constant 0 : i32
    %c0_i32_1 = arith.constant 0 : i32
    return %arg0, %c0_i32, %c0_i32_0 : i32, i32, i32
  }
  func.func @transform_1(%arg0: i32) -> (i32, i32) {
    %c0_i32 = arith.constant 0 : i32
    %c0_i32_0 = arith.constant 0 : i32
    %c0_i32_1 = arith.constant 0 : i32
    return %c0_i32, %c0_i32_0 : i32, i32
  }
  func.func @transform_2(%arg0: i32) -> (i32, i32) {
    %c0_i32 = arith.constant 0 : i32
    %c0_i32_0 = arith.constant 0 : i32
    %c0_i32_1 = arith.constant 0 : i32
    return %c0_i32, %c0_i32_0 : i32, i32
  }
  func.func @transform_3(%arg0: i32) -> (i32, i32, i32) {
    %c0_i32 = arith.constant 0 : i32
    %c0_i32_0 = arith.constant 0 : i32
    %c0_i32_1 = arith.constant 0 : i32
    %c0_i32_2 = arith.constant 0 : i32
    return %c0_i32, %c0_i32_0, %c0_i32_1 : i32, i32, i32
  }
  func.func @transform_4(%arg0: i32) -> (i32, i32) {
    %c0_i32 = arith.constant 0 : i32
    %c0_i32_0 = arith.constant 0 : i32
    %c0_i32_1 = arith.constant 0 : i32
    return %c0_i32, %c0_i32_0 : i32, i32
  }
  func.func @transform_5(%arg0: i32) -> (i32, i32, i32) {
    %c0_i32 = arith.constant 0 : i32
    %c0_i32_0 = arith.constant 0 : i32
    %c0_i32_1 = arith.constant 0 : i32
    %c0_i32_2 = arith.constant 0 : i32
    return %c0_i32, %c0_i32_0, %c0_i32_1 : i32, i32, i32
  }
  func.func @transform_6(%arg0: i32) -> (i32, i32) {
    %c0_i32 = arith.constant 0 : i32
    %c0_i32_0 = arith.constant 0 : i32
    %c0_i32_1 = arith.constant 0 : i32
    return %c0_i32, %c0_i32_0 : i32, i32
  }
  func.func @transform_7(%arg0: i32) -> (i32, i32) {
    %c0_i32 = arith.constant 0 : i32
    %c0_i32_0 = arith.constant 0 : i32
    %c0_i32_1 = arith.constant 0 : i32
    return %c0_i32, %c0_i32_0 : i32, i32
  }
  func.func @transform_8(%arg0: i32) -> (i32, i32) {
    %c0_i32 = arith.constant 0 : i32
    %c0_i32_0 = arith.constant 0 : i32
    %c0_i32_1 = arith.constant 0 : i32
    return %c0_i32, %c0_i32_0 : i32, i32
  }
  func.func @transform_9(%arg0: i32) -> (i32, i32, i32) {
    %c0_i32 = arith.constant 0 : i32
    %c0_i32_0 = arith.constant 0 : i32
    %c0_i32_1 = arith.constant 0 : i32
    return %arg0, %c0_i32, %c0_i32_0 : i32, i32, i32
  }
}

</mosaic_0001>

<llo_original>
// kernel: tpu_custom_call.1
$region0: #{tpu_custom_call.1}
  #allocation0 [shape = 'u32[]', space=smem, size = 0x4, offset = 0x4, fixed_abs, tag = 'smem constant byte address 0x4 - core index']
  #allocation1 [shape = 'u32[144,128]{1,0:T(1,128)}', space=vmem, size = 0x12000, scoped, tag = 'internal scratch']
  %s0 = inlined_call_operand.vmem [shape: bf16[2,8,256], index: 0, kind: input, shape index: {}]
  %s1 = inlined_call_operand.vmem [shape: bf16[8,8], index: 1, kind: input, shape index: {}]
  %s2 = inlined_call_operand.vmem [shape: f32[8,1], index: 2, kind: input, shape index: {}]
  %s3 = inlined_call_operand.vmem [shape: bf16[3,8,8], index: 3, kind: input, shape index: {}]
  %s4 = inlined_call_operand.vmem [shape: f32[8,1], index: 4, kind: input, shape index: {}]
  %s5 = inlined_call_operand.vmem [shape: bf16[3,8,8], index: 5, kind: input, shape index: {}]
  %s6 = inlined_call_operand.vmem [shape: f32[8,1], index: 6, kind: input, shape index: {}]
  %s7 = inlined_call_operand.vmem [shape: bf16[16,8], index: 7, kind: input, shape index: {}]
  %s8 = inlined_call_operand.vmem [shape: f32[16,1], index: 8, kind: input, shape index: {}]
  %s9 = inlined_call_operand.hbm [shape: f32[2,16,256], index: 9, kind: output, shape index: {}]
  %s10 = sld [smem:[#allocation0]]
  $region69: #{tpu_custom_call.1} parent=0
    _
  %s12 = ssub.s32 1, %s10
  %s13 = scalar_select 0, %s12, %s10
  $region1: #{tpu_custom_call.1} parent=0
    #allocation2 [shape = 'u8[32768]{0}', space=vmem, size = 0x8000, scoped, tag = 'output window, operand 0']
    #allocation3 [shape = 's32[2]{0}', space=sflag, size = 0x8, scoped, tag = 'scoped memory for tpu_custom_call.1']
    %14 = vsyncpa [#allocation3], 0
    %s15 = scalar_lea.sflag [#allocation3], 1
    %16 = vsyncpa %s15, 0
    loop: start=0, step=1, limit=4
    $region2: #{tpu_custom_call.1} parent=1 // loop_pre_header
      _
    $region3: #{tpu_custom_call.1} parent=1 // loop_header
      %s18 = sphi 0, %s22
      %p19 = scmp.ge.s32.totalorder %s18, 4
      %s28 = sphi 0, %s30
      %s31 = sphi 0, %s28
      %s32 = sphi 0, %s31
      %s48 = sphi 0, %s32
      %s52 = sphi 0, %s52
      %s54 = sphi 0, %s52
      %s55 = sphi 0, %s54
      %s69 = sphi 0, %s55
      %s73 = sphi 0, %s73
      %s75 = sphi 0, %s73
      %s76 = sphi 0, %s75
      %s90 = sphi 0, %s76
      %s94 = sphi 0, %s94
      %s96 = sphi 0, %s94
      %s97 = sphi 0, %s96
      %s111 = sphi 0, %s97
      %s115 = sphi 0, %s115
      %s117 = sphi 0, %s115
      %s118 = sphi 0, %s117
      %s132 = sphi 0, %s118
      %s136 = sphi 0, %s136
      %s138 = sphi 0, %s136
      %s139 = sphi 0, %s138
      %s153 = sphi 0, %s139
      %s157 = sphi 0, %s157
      %s159 = sphi 0, %s157
      %s160 = sphi 0, %s159
      %s174 = sphi 0, %s160
      %s178 = sphi 0, %s178
      %s180 = sphi 0, %s178
      %s181 = sphi 0, %s180
      %s195 = sphi 0, %s181
      %s199 = sphi 0, %s199
      %s201 = sphi 0, %s199
      %s202 = sphi 0, %s201
      %s216 = sphi 0, %s202
      %s222 = sphi 0, %s224
      %s225 = sphi 0, %s222
      %s226 = sphi 0, %s225
      %s242 = sphi 0, %s226
    $region4: #{tpu_custom_call.1} parent=1 // loop_header_branch
      %21 = sbr.rel (%p19) target = $region8
    $region5: #{tpu_custom_call.1} parent=1 // loop_body
      %s23 = ssub.s32 %s18, 1
      %s24 = ssub.s32 %s18, 2
      %s25 = sadd.s32 %s18, 1
      %s26 = ssub.s32 %s18, %s25
      %p27 = scmp.eq.s32.totalorder %s26, 0
      %s29 = sadd.s32 %s28, 1
      %s30 = scalar_select %p27, %s28, %s29
      %p33 = pneg %p27
      %p34 = scmp.eq.s32.totalorder %s18, 1
      %p35 = por %p33, %p34
      %p36 = scmp.ne.s32.totalorder %s28, %s31
      %p37 = scmp.eq.s32.totalorder %s18, 0
      %p38 = por %p36, %p37
      %p39 = scmp.ne.s32.totalorder %s28, %s31
      %p40 = scmp.eq.s32.totalorder %s23, 1
      %p41 = por %p39, %p40
      %p42 = scmp.ne.s32.totalorder %s31, %s32
      %p43 = scmp.eq.s32.totalorder %s23, 0
      %p44 = por %p42, %p43
      %p45 = scmp.ne.s32.totalorder %s31, %s32
      %p46 = scmp.eq.s32.totalorder %s24, 1
      %p47 = por %p45, %p46
      %p49 = scmp.ne.s32.totalorder %s32, %s48
      %p50 = scmp.eq.s32.totalorder %s24, 0
      %p51 = por %p49, %p50
      %s53 = sadd.s32 %s52, 1
      %p56 = scmp.eq.s32.totalorder %s18, 1
      %p57 = scmp.ne.s32.totalorder %s52, %s54
      %p58 = scmp.eq.s32.totalorder %s18, 0
      %p59 = por %p57, %p58
      %p60 = scmp.ne.s32.totalorder %s52, %s54
      %p61 = scmp.eq.s32.totalorder %s23, 1
      %p62 = por %p60, %p61
      %p63 = scmp.ne.s32.totalorder %s54, %s55
      %p64 = scmp.eq.s32.totalorder %s23, 0
      %p65 = por %p63, %p64
      %p66 = scmp.ne.s32.totalorder %s54, %s55
      %p67 = scmp.eq.s32.totalorder %s24, 1
      %p68 = por %p66, %p67
      %p70 = scmp.ne.s32.totalorder %s55, %s69
      %p71 = scmp.eq.s32.totalorder %s24, 0
      %p72 = por %p70, %p71
      %s74 = sadd.s32 %s73, 1
      %p77 = scmp.eq.s32.totalorder %s18, 1
      %p78 = scmp.ne.s32.totalorder %s73, %s75
      %p79 = scmp.eq.s32.totalorder %s18, 0
      %p80 = por %p78, %p79
      %p81 = scmp.ne.s32.totalorder %s73, %s75
      %p82 = scmp.eq.s32.totalorder %s23, 1
      %p83 = por %p81, %p82
      %p84 = scmp.ne.s32.totalorder %s75, %s76
      %p85 = scmp.eq.s32.totalorder %s23, 0
      %p86 = por %p84, %p85
      %p87 = scmp.ne.s32.totalorder %s75, %s76
      %p88 = scmp.eq.s32.totalorder %s24, 1
      %p89 = por %p87, %p88
      %p91 = scmp.ne.s32.totalorder %s76, %s90
      %p92 = scmp.eq.s32.totalorder %s24, 0
      %p93 = por %p91, %p92
      %s95 = sadd.s32 %s94, 1
      %p98 = scmp.eq.s32.totalorder %s18, 1
      %p99 = scmp.ne.s32.totalorder %s94, %s96
      %p100 = scmp.eq.s32.totalorder %s18, 0
      %p101 = por %p99, %p100
      %p102 = scmp.ne.s32.totalorder %s94, %s96
      %p103 = scmp.eq.s32.totalorder %s23, 1
      %p104 = por %p102, %p103
      %p105 = scmp.ne.s32.totalorder %s96, %s97
      %p106 = scmp.eq.s32.totalorder %s23, 0
      %p107 = por %p105, %p106
      %p108 = scmp.ne.s32.totalorder %s96, %s97
      %p109 = scmp.eq.s32.totalorder %s24, 1
      %p110 = por %p108, %p109
      %p112 = scmp.ne.s32.totalorder %s97, %s111
      %p113 = scmp.eq.s32.totalorder %s24, 0
      %p114 = por %p112, %p113
      %s116 = sadd.s32 %s115, 1
      %p119 = scmp.eq.s32.totalorder %s18, 1
      %p120 = scmp.ne.s32.totalorder %s115, %s117
      %p121 = scmp.eq.s32.totalorder %s18, 0
      %p122 = por %p120, %p121
      %p123 = scmp.ne.s32.totalorder %s115, %s117
      %p124 = scmp.eq.s32.totalorder %s23, 1
      %p125 = por %p123, %p124
      %p126 = scmp.ne.s32.totalorder %s117, %s118
      %p127 = scmp.eq.s32.totalorder %s23, 0
      %p128 = por %p126, %p127
      %p129 = scmp.ne.s32.totalorder %s117, %s118
      %p130 = scmp.eq.s32.totalorder %s24, 1
      %p131 = por %p129, %p130
      %p133 = scmp.ne.s32.totalorder %s118, %s132
      %p134 = scmp.eq.s32.totalorder %s24, 0
      %p135 = por %p133, %p134
      %s137 = sadd.s32 %s136, 1
      %p140 = scmp.eq.s32.totalorder %s18, 1
      %p141 = scmp.ne.s32.totalorder %s136, %s138
      %p142 = scmp.eq.s32.totalorder %s18, 0
      %p143 = por %p141, %p142
      %p144 = scmp.ne.s32.totalorder %s136, %s138
      %p145 = scmp.eq.s32.totalorder %s23, 1
      %p146 = por %p144, %p145
      %p147 = scmp.ne.s32.totalorder %s138, %s139
      %p148 = scmp.eq.s32.totalorder %s23, 0
      %p149 = por %p147, %p148
      %p150 = scmp.ne.s32.totalorder %s138, %s139
      %p151 = scmp.eq.s32.totalorder %s24, 1
      %p152 = por %p150, %p151
      %p154 = scmp.ne.s32.totalorder %s139, %s153
      %p155 = scmp.eq.s32.totalorder %s24, 0
      %p156 = por %p154, %p155
      %s158 = sadd.s32 %s157, 1
      %p161 = scmp.eq.s32.totalorder %s18, 1
      %p162 = scmp.ne.s32.totalorder %s157, %s159
      %p163 = scmp.eq.s32.totalorder %s18, 0
      %p164 = por %p162, %p163
      %p165 = scmp.ne.s32.totalorder %s157, %s159
      %p166 = scmp.eq.s32.totalorder %s23, 1
      %p167 = por %p165, %p166
      %p168 = scmp.ne.s32.totalorder %s159, %s160
      %p169 = scmp.eq.s32.totalorder %s23, 0
      %p170 = por %p168, %p169
      %p171 = scmp.ne.s32.totalorder %s159, %s160
      %p172 = scmp.eq.s32.totalorder %s24, 1
      %p173 = por %p171, %p172
      %p175 = scmp.ne.s32.totalorder %s160, %s174
      %p176 = scmp.eq.s32.totalorder %s24, 0
      %p177 = por %p175, %p176
      %s179 = sadd.s32 %s178, 1
      %p182 = scmp.eq.s32.totalorder %s18, 1
      %p183 = scmp.ne.s32.totalorder %s178, %s180
      %p184 = scmp.eq.s32.totalorder %s18, 0
      %p185 = por %p183, %p184
      %p186 = scmp.ne.s32.totalorder %s178, %s180
      %p187 = scmp.eq.s32.totalorder %s23, 1
      %p188 = por %p186, %p187
      %p189 = scmp.ne.s32.totalorder %s180, %s181
      %p190 = scmp.eq.s32.totalorder %s23, 0
      %p191 = por %p189, %p190
      %p192 = scmp.ne.s32.totalorder %s180, %s181
      %p193 = scmp.eq.s32.totalorder %s24, 1
      %p194 = por %p192, %p193
      %p196 = scmp.ne.s32.totalorder %s181, %s195
      %p197 = scmp.eq.s32.totalorder %s24, 0
      %p198 = por %p196, %p197
      %s200 = sadd.s32 %s199, 1
      %p203 = scmp.eq.s32.totalorder %s18, 1
      %p204 = scmp.ne.s32.totalorder %s199, %s201
      %p205 = scmp.eq.s32.totalorder %s18, 0
      %p206 = por %p204, %p205
      %p207 = scmp.ne.s32.totalorder %s199, %s201
      %p208 = scmp.eq.s32.totalorder %s23, 1
      %p209 = por %p207, %p208
      %p210 = scmp.ne.s32.totalorder %s201, %s202
      %p211 = scmp.eq.s32.totalorder %s23, 0
      %p212 = por %p210, %p211
      %p213 = scmp.ne.s32.totalorder %s201, %s202
      %p214 = scmp.eq.s32.totalorder %s24, 1
      %p215 = por %p213, %p214
      %p217 = scmp.ne.s32.totalorder %s202, %s216
      %p218 = scmp.eq.s32.totalorder %s24, 0
      %p219 = por %p217, %p218
      %s220 = ssub.s32 %s18, %s25
      %p221 = scmp.eq.s32.totalorder %s220, 0
      %s223 = sadd.s32 %s222, 1
      %s224 = scalar_select %p221, %s222, %s223
      %p227 = pneg %p221
      %p228 = scmp.eq.s32.totalorder %s18, 1
      %p229 = por %p227, %p228
      %p230 = scmp.ne.s32.totalorder %s222, %s225
      %p231 = scmp.eq.s32.totalorder %s18, 0
      %p232 = por %p230, %p231
      %p233 = scmp.ne.s32.totalorder %s222, %s225
      %p234 = scmp.eq.s32.totalorder %s23, 1
      %p235 = por %p233, %p234
      %p236 = scmp.ne.s32.totalorder %s225, %s226
      %p237 = scmp.eq.s32.totalorder %s23, 0
      %p238 = por %p236, %p237
      %p239 = scmp.ne.s32.totalorder %s225, %s226
      %p240 = scmp.eq.s32.totalorder %s24, 1
      %p241 = por %p239, %p240
      %p243 = scmp.ne.s32.totalorder %s226, %s242
      %p244 = scmp.eq.s32.totalorder %s24, 0
      %p245 = por %p243, %p244
      %p246 = scmp.le.s32.totalorder 1, %s18
      %p247 = scmp.lt.s32.totalorder %s18, 3
      %p248 = pnand %p246, %p247
      %p249 = pneg %p248
      // Predicated region
      $region9: #{tpu_custom_call.1} parent=5 // pred_check
        _
      $region10: #{tpu_custom_call.1} parent=5 // pred_check_branch
        %251 = sbr.rel (%p248) target = $region12
      $region11: #{tpu_custom_call.1} parent=5 // pred_region
        %s252 = ssub.s32 %s18, 1
        // Predicated region
        $region13: #{tpu_custom_call.1} parent=11 // pred_check
          %p253 = pneg %p65
        $region14: #{tpu_custom_call.1} parent=11 // pred_check_branch
          %255 = sbr.rel (%p253) target = $region16
        $region15: #{tpu_custom_call.1} parent=11 // pred_region
          _
        $region16: #{tpu_custom_call.1} parent=11 // pred_fallthru
          _
        // Predicated region
        $region17: #{tpu_custom_call.1} parent=11 // pred_check
          %p256 = pneg %p86
        $region18: #{tpu_custom_call.1} parent=11 // pred_check_branch
          %258 = sbr.rel (%p256) target = $region20
        $region19: #{tpu_custom_call.1} parent=11 // pred_region
          _
        $region20: #{tpu_custom_call.1} parent=11 // pred_fallthru
          _
        // Predicated region
        $region21: #{tpu_custom_call.1} parent=11 // pred_check
          %p259 = pneg %p107
        $region22: #{tpu_custom_call.1} parent=11 // pred_check_branch
          %261 = sbr.rel (%p259) target = $region24
        $region23: #{tpu_custom_call.1} parent=11 // pred_region
          _
        $region24: #{tpu_custom_call.1} parent=11 // pred_fallthru
          _
        // Predicated region
        $region25: #{tpu_custom_call.1} parent=11 // pred_check
          %p262 = pneg %p128
        $region26: #{tpu_custom_call.1} parent=11 // pred_check_branch
          %264 = sbr.rel (%p262) target = $region28
        $region27: #{tpu_custom_call.1} parent=11 // pred_region
          _
        $region28: #{tpu_custom_call.1} parent=11 // pred_fallthru
          _
        // Predicated region
        $region29: #{tpu_custom_call.1} parent=11 // pred_check
          %p265 = pneg %p149
        $region30: #{tpu_custom_call.1} parent=11 // pred_check_branch
          %267 = sbr.rel (%p265) target = $region32
        $region31: #{tpu_custom_call.1} parent=11 // pred_region
          _
        $region32: #{tpu_custom_call.1} parent=11 // pred_fallthru
          _
        // Predicated region
        $region33: #{tpu_custom_call.1} parent=11 // pred_check
          %p268 = pneg %p170
        $region34: #{tpu_custom_call.1} parent=11 // pred_check_branch
          %270 = sbr.rel (%p268) target = $region36
        $region35: #{tpu_custom_call.1} parent=11 // pred_region
          _
        $region36: #{tpu_custom_call.1} parent=11 // pred_fallthru
          _
        // Predicated region
        $region37: #{tpu_custom_call.1} parent=11 // pred_check
          %p271 = pneg %p191
        $region38: #{tpu_custom_call.1} parent=11 // pred_check_branch
          %273 = sbr.rel (%p271) target = $region40
        $region39: #{tpu_custom_call.1} parent=11 // pred_region
          _
        $region40: #{tpu_custom_call.1} parent=11 // pred_fallthru
          _
        // Predicated region
        $region41: #{tpu_custom_call.1} parent=11 // pred_check
          %p274 = pneg %p212
        $region42: #{tpu_custom_call.1} parent=11 // pred_check_branch
          %276 = sbr.rel (%p274) target = $region44
        $region43: #{tpu_custom_call.1} parent=11 // pred_region
          _
        $region44: #{tpu_custom_call.1} parent=11 // pred_fallthru
          _
      $region12: #{tpu_custom_call.1} parent=5 // pred_fallthru
        _
      %p277 = scmp.lt.s32.totalorder %s18, 2
      // Predicated region
      $region45: #{tpu_custom_call.1} parent=5 // pred_check
        %p278 = pneg %p277
      $region46: #{tpu_custom_call.1} parent=5 // pred_check_branch
        %280 = sbr.rel (%p278) target = $region48
      $region47: #{tpu_custom_call.1} parent=5 // pred_region
        // Predicated region
        $region49: #{tpu_custom_call.1} parent=47 // pred_check
          %p281 = pneg %p38
        $region50: #{tpu_custom_call.1} parent=47 // pred_check_branch
          %283 = sbr.rel (%p281) target = $region52
        $region51: #{tpu_custom_call.1} parent=47 // pred_region
          %p284 = scmp.lt.s32.totalorder %s18, 1
          %s285 = scalar_select %p284, %s18, 1
          %s286 = smul.addr %s285, 2
          %s287 = smul.addr %s286, 4
          %s288 = scalar_lea.vmem %s0, %s287
        $region52: #{tpu_custom_call.1} parent=47 // pred_fallthru
          _
      $region48: #{tpu_custom_call.1} parent=5 // pred_fallthru
        _
      %p289 = scmp.le.s32.totalorder 1, %s18
      %p290 = scmp.lt.s32.totalorder %s18, 3
      %p291 = pnand %p289, %p290
      %p292 = pneg %p291
      // Predicated region
      $region53: #{tpu_custom_call.1} parent=5 // pred_check
        _
      $region54: #{tpu_custom_call.1} parent=5 // pred_check_branch
        %294 = sbr.rel (%p291) target = $region56
      $region55: #{tpu_custom_call.1} parent=5 // pred_region
        %s295 = ssub.s32 %s18, 1
        %p296 = scmp.lt.s32.totalorder %s23, 1
        %s297 = scalar_select %p296, %s23, 1
        %s298 = smul.addr %s297, 2
        %s299 = smul.addr %s298, 4
        %s300 = scalar_lea.vmem %s0, %s299
        %p301 = pneg %p44
        %p302 = pneg %p41
        %p303 = pneg %p65
        %p304 = pneg %p62
        %p305 = pneg %p86
        %p306 = pneg %p83
        %p307 = pneg %p107
        %p308 = pneg %p104
        %p309 = pneg %p128
        %p310 = pneg %p125
        %p311 = pneg %p149
        %p312 = pneg %p146
        %p313 = pneg %p170
        %p314 = pneg %p167
        %p315 = pneg %p191
        %p316 = pneg %p188
        %p317 = pneg %p212
        %p318 = pneg %p209
        %p319 = pneg %p238
        %p320 = pneg %p235
        %s321 = sand.u32 %s225, 1
        %s322 = scalar_lea.sflag [#allocation3], %s321
        %s323 = sand.u32 %s225, 1
        %s324 = smul.addr %s323, 32
        %s325 = scalar_lea.vmem [#allocation2], %s324
        %p326 = scmp.lt.s32.totalorder %s23, 1
        %s327 = scalar_select %p326, %s23, 1
        %s328 = smul.addr %s327, 2
        %s329 = smul.addr %s328, 4
        %s330 = scalar_lea.vmem %s0, %s329
        %v332 = vld [vmem:[%s330] sm:$0xff]
        %v333 = vlaneseq
        %v334 = vand.u32 %v333, 127
        %v335 = vadd.s32 %v334, 128
        %vm336 = vcmp.lt.s32.totalorder %v334, 0
        %v337 = vsub.s32 0, %v334
        %v338 = vsel %vm336, %v337, %v334
        %v339 = vshrl.u32 %v338, 8
        %v340 = vand.u32 %v338, 255
        %v341 = vsub.s32 0, %v340
        %v342 = vsel %vm336, %v341, %v340
        %vm343 = vcmp.lt.s32.totalorder %v335, 0
        %v344 = vsub.s32 0, %v335
        %v345 = vsel %vm343, %v344, %v335
        %v346 = vshrl.u32 %v345, 8
        %v347 = vand.u32 %v345, 255
        %v348 = vsub.s32 0, %v347
        %v349 = vsel %vm343, %v348, %v347
        %vm350 = vcmp.ne.s32.totalorder %v342, 0
        %vm351 = vcmp.ne.s32.totalorder %v349, 0
        %vm352 = vcmp.lt.s32.totalorder %v342, 0
        %vm353 = vcmp.lt.s32.totalorder %v349, 0
        %vm354 = vmand %vm352, %vm350
        %vm355 = vmand %vm353, %vm351
        %v356 = vadd.s32 %v342, 256
        %v357 = vadd.s32 %v349, 256
        %v358 = vsel %vm354, %v356, %v342
        %v359 = vsel %vm355, %v357, %v349
        %vm360 = vcmp.lt.s32.totalorder %v358, 0
        %v361 = vsub.s32 0, %v358
        %v362 = vsel %vm360, %v361, %v358
        %v363 = vshrl.u32 %v362, 4
        %v364 = vand.u32 %v362, 15
        %v365 = vsub.s32 0, %v364
        %v366 = vsel %vm360, %v365, %v364
        %vm367 = vcmp.lt.s32.totalorder %v359, 0
        %v368 = vsub.s32 0, %v359
        %v369 = vsel %vm367, %v368, %v359
        %v370 = vshrl.u32 %v369, 4
        %v371 = vand.u32 %v369, 15
        %v372 = vsub.s32 0, %v371
        %v373 = vsel %vm367, %v372, %v371
        %vm374 = vcmp.ne.s32.totalorder %v366, 0
        %vm375 = vcmp.ne.s32.totalorder %v373, 0
        %vm376 = vcmp.lt.s32.totalorder %v366, 0
        %vm377 = vcmp.lt.s32.totalorder %v373, 0
        %vm378 = vmand %vm376, %vm374
        %vm379 = vmand %vm377, %vm375
        %v380 = vadd.s32 %v366, 16
        %v381 = vadd.s32 %v373, 16
        %v382 = vsel %vm378, %v380, %v366
        %v383 = vsel %vm379, %v381, %v373
        %v384 = vld [vmem:[%s1] sm:$0xf]
        %v385 = vld [vmem:[%s2] sm:$0xff]
        %387 = vset.pattern.permute.xlu0 0
        %388 = vperm.xlu0 %387, %v385
        %v389 = vpop.permute.xlu0 %388
        %v392 = vunpack.c.l.b16 %v332
        %v393 = vunpack.c.h.b16 %v332
        %v394 = vpack.c.b16 %v392, %v392
        %v395 = vpack.c.b16 %v393, %v393
        %vm396 = vcmask 64512
        %v398 = vsel %vm396, %v384, 0
        %vm400 = vcmask 1043456
        %v402 = vsel %vm400, %v394, 0
        %v405 = vsel %vm400, %v395, 0
        %407 = vmatprep.subr.bf16.mxu0 %v405
        %408 = vmatpush1.bf16.msra.mxu0 %v402
        %409 = vmatprep.subr.bf16.mxu0 0
        %410 = vmatpush1.bf16.msra.mxu0 0
        %411 = vmatprep.subr.bf16.mxu0 0
        %412 = vmatpush1.bf16.msra.mxu0 0
        %413 = vmatprep.subr.bf16.mxu0 0
        %414 = vmatpush1.bf16.msra.mxu0 0
        %415 = vmatprep.subr.bf16.mxu0 0
        %416 = vmatpush1.bf16.msra.mxu0 0
        %417 = vmatprep.subr.bf16.mxu0 0
        %418 = vmatpush1.bf16.msra.mxu0 0
        %419 = vmatprep.subr.bf16.mxu0 0
        %420 = vmatpush1.bf16.msra.mxu0 0
        %421 = vmatprep.subr.bf16.mxu0 0
        %422 = vmatpush1.bf16.msra.mxu0 0
        %423 = vmatprep.subr.bf16.mxu0 0
        %424 = vmatpush1.bf16.msra.mxu0 0
        %425 = vmatprep.subr.bf16.mxu0 0
        %426 = vmatpush1.bf16.msra.mxu0 0
        %427 = vmatprep.subr.bf16.mxu0 0
        %428 = vmatpush1.bf16.msra.mxu0 0
        %429 = vmatprep.subr.bf16.mxu0 0
        %430 = vmatpush1.bf16.msra.mxu0 0
        %431 = vmatprep.subr.bf16.mxu0 0
        %432 = vmatpush1.bf16.msra.mxu0 0
        %433 = vmatprep.subr.bf16.mxu0 0
        %434 = vmatpush1.bf16.msra.mxu0 0
        %435 = vmatprep.subr.bf16.mxu0 0
        %436 = vmatpush1.bf16.msra.mxu0 0
        %437 = vmatprep.subr.bf16.mxu0 0
        %438 = vmatpush1.bf16.msra.mxu0 0
        %439 = vmatprep.mubr.bf16.mxu0 0
        %440 = vmatmul.mubr.bf16.gmra.mrb[0].mxu0 %v398
        %v441 = vpop.f32.mrb[0].mxu0
        %v442 = vadd.f32 %v389, %v441
        %v443 = vpop.f32.mrb[0].mxu0
        %v444 = vadd.f32 %v389, %v443
        %v445 = vpop.f32.mrb[0].mxu0
        %v446 = vpop.f32.mrb[0].mxu0
        %447 = vdwg.mxu0
        %v448 = vmax.f32 %v442, 0.0
        %v449 = vmax.f32 %v444, 0.0
        %vm450 = vcmp.ge.s32.totalorder %v358, 16
        %vm451 = vcmp.ge.s32.totalorder %v359, 16
        %452 = vrot.lane.b32.xlu0 %v448, 16
        %v453 = vpop.permute.xlu0 %452
        %454 = vrot.lane.b32.xlu0 %v449, 16
        %v455 = vpop.permute.xlu0 %454
        %vm456 = vcmp.lt.s32.totalorder %v334, 16
        %v457 = vsel %vm456, %v453, %v455
        %v458 = vsel %vm456, %v455, %v453
        %v459 = vsel %vm450, 1, 0
        %v460 = vsel %vm451, 1, 0
        %vm461 = vcmp.eq.s32.totalorder %v459, 1
        %vm462 = vcmp.eq.s32.totalorder %v460, 1
        %v463 = vsel %vm461, %v458, 0.0
        %v464 = vsel %vm462, %v457, 0.0
        %vm465 = vcmp.lt.s32.totalorder %v358, 240
        %vm466 = vcmp.lt.s32.totalorder %v359, 240
        %467 = vrot.lane.b32.xlu0 %v448, 112
        %v468 = vpop.permute.xlu0 %467
        %469 = vrot.lane.b32.xlu0 %v449, 112
        %v470 = vpop.permute.xlu0 %469
        %vm471 = vcmp.lt.s32.totalorder %v334, 112
        %v472 = vsel %vm471, %v468, %v470
        %v473 = vsel %vm471, %v470, %v468
        %v474 = vsel %vm465, 1, 0
        %v475 = vsel %vm466, 1, 0
        %vm476 = vcmp.eq.s32.totalorder %v474, 1
        %vm477 = vcmp.eq.s32.totalorder %v475, 1
        %v478 = vsel %vm476, %v472, 0.0
        %v479 = vsel %vm477, %v473, 0.0
        %v480 = vld [vmem:[%s3] sm:$0xf]
        %v481 = vpack.c.bf16 %v463, %v463
        %v482 = vpack.c.bf16 %v464, %v464
        %s483 = scalar_lea.vmem %s3, 4
        %v484 = vld [vmem:[%s483] sm:$0xf]
        %v485 = vpack.c.bf16 %v448, %v448
        %v486 = vpack.c.bf16 %v449, %v449
        %v488 = vsel %vm396, %v484, 0
        %v491 = vsel %vm400, %v485, 0
        %v494 = vsel %vm400, %v486, 0
        %496 = vmatprep.subr.bf16.mxu0 %v494
        %497 = vmatpush1.bf16.msra.mxu0 %v491
        %498 = vmatprep.subr.bf16.mxu0 0
        %499 = vmatpush1.bf16.msra.mxu0 0
        %500 = vmatprep.subr.bf16.mxu0 0
        %501 = vmatpush1.bf16.msra.mxu0 0
        %502 = vmatprep.subr.bf16.mxu0 0
        %503 = vmatpush1.bf16.msra.mxu0 0
        %504 = vmatprep.subr.bf16.mxu0 0
        %505 = vmatpush1.bf16.msra.mxu0 0
        %506 = vmatprep.subr.bf16.mxu0 0
        %507 = vmatpush1.bf16.msra.mxu0 0
        %508 = vmatprep.subr.bf16.mxu0 0
        %509 = vmatpush1.bf16.msra.mxu0 0
        %510 = vmatprep.subr.bf16.mxu0 0
        %511 = vmatpush1.bf16.msra.mxu0 0
        %512 = vmatprep.subr.bf16.mxu0 0
        %513 = vmatpush1.bf16.msra.mxu0 0
        %514 = vmatprep.subr.bf16.mxu0 0
        %515 = vmatpush1.bf16.msra.mxu0 0
        %516 = vmatprep.subr.bf16.mxu0 0
        %517 = vmatpush1.bf16.msra.mxu0 0
        %518 = vmatprep.subr.bf16.mxu0 0
        %519 = vmatpush1.bf16.msra.mxu0 0
        %520 = vmatprep.subr.bf16.mxu0 0
        %521 = vmatpush1.bf16.msra.mxu0 0
        %522 = vmatprep.subr.bf16.mxu0 0
        %523 = vmatpush1.bf16.msra.mxu0 0
        %524 = vmatprep.subr.bf16.mxu0 0
        %525 = vmatpush1.bf16.msra.mxu0 0
        %526 = vmatprep.subr.bf16.mxu0 0
        %527 = vmatpush1.bf16.msra.mxu0 0
        %528 = vmatprep.mubr.bf16.mxu0 0
        %529 = vmatmul.mubr.bf16.gmra.mrb[0].mxu0 %v488
        %v530 = vpop.f32.mrb[0].mxu0
        %v531 = vadd.f32 0.0, %v530
        %v532 = vpop.f32.mrb[0].mxu0
        %v533 = vadd.f32 0.0, %v532
        %v534 = vpop.f32.mrb[0].mxu0
        %v535 = vpop.f32.mrb[0].mxu0
        %536 = vdwg.mxu0
        %v538 = vsel %vm396, %v480, 0
        %v541 = vsel %vm400, %v481, 0
        %v544 = vsel %vm400, %v482, 0
        %546 = vmatprep.subr.bf16.mxu0 %v544
        %547 = vmatpush1.bf16.msra.mxu0 %v541
        %548 = vmatprep.subr.bf16.mxu0 0
        %549 = vmatpush1.bf16.msra.mxu0 0
        %550 = vmatprep.subr.bf16.mxu0 0
        %551 = vmatpush1.bf16.msra.mxu0 0
        %552 = vmatprep.subr.bf16.mxu0 0
        %553 = vmatpush1.bf16.msra.mxu0 0
        %554 = vmatprep.subr.bf16.mxu0 0
        %555 = vmatpush1.bf16.msra.mxu0 0
        %556 = vmatprep.subr.bf16.mxu0 0
        %557 = vmatpush1.bf16.msra.mxu0 0
        %558 = vmatprep.subr.bf16.mxu0 0
        %559 = vmatpush1.bf16.msra.mxu0 0
        %560 = vmatprep.subr.bf16.mxu0 0
        %561 = vmatpush1.bf16.msra.mxu0 0
        %562 = vmatprep.subr.bf16.mxu0 0
        %563 = vmatpush1.bf16.msra.mxu0 0
        %564 = vmatprep.subr.bf16.mxu0 0
        %565 = vmatpush1.bf16.msra.mxu0 0
        %566 = vmatprep.subr.bf16.mxu0 0
        %567 = vmatpush1.bf16.msra.mxu0 0
        %568 = vmatprep.subr.bf16.mxu0 0
        %569 = vmatpush1.bf16.msra.mxu0 0
        %570 = vmatprep.subr.bf16.mxu0 0
        %571 = vmatpush1.bf16.msra.mxu0 0
        %572 = vmatprep.subr.bf16.mxu0 0
        %573 = vmatpush1.bf16.msra.mxu0 0
        %574 = vmatprep.subr.bf16.mxu0 0
        %575 = vmatpush1.bf16.msra.mxu0 0
        %576 = vmatprep.subr.bf16.mxu0 0
        %577 = vmatpush1.bf16.msra.mxu0 0
        %578 = vmatprep.mubr.bf16.mxu0 0
        %579 = vmatmul.mubr.bf16.gmra.mrb[0].mxu0 %v538
        %v580 = vpop.f32.mrb[0].mxu0
        %v581 = vadd.f32 %v531, %v580
        %v582 = vpop.f32.mrb[0].mxu0
        %v583 = vadd.f32 %v533, %v582
        %v584 = vpop.f32.mrb[0].mxu0
        %v585 = vpop.f32.mrb[0].mxu0
        %586 = vdwg.mxu0
        %s587 = scalar_lea.vmem %s3, 8
        %v588 = vld [vmem:[%s587] sm:$0xf]
        %v589 = vpack.c.bf16 %v478, %v478
        %v590 = vpack.c.bf16 %v479, %v479
        %v592 = vsel %vm396, %v588, 0
        %v595 = vsel %vm400, %v589, 0
        %v598 = vsel %vm400, %v590, 0
        %600 = vmatprep.subr.bf16.mxu0 %v598
        %601 = vmatpush1.bf16.msra.mxu0 %v595
        %602 = vmatprep.subr.bf16.mxu0 0
        %603 = vmatpush1.bf16.msra.mxu0 0
        %604 = vmatprep.subr.bf16.mxu0 0
        %605 = vmatpush1.bf16.msra.mxu0 0
        %606 = vmatprep.subr.bf16.mxu0 0
        %607 = vmatpush1.bf16.msra.mxu0 0
        %608 = vmatprep.subr.bf16.mxu0 0
        %609 = vmatpush1.bf16.msra.mxu0 0
        %610 = vmatprep.subr.bf16.mxu0 0
        %611 = vmatpush1.bf16.msra.mxu0 0
        %612 = vmatprep.subr.bf16.mxu0 0
        %613 = vmatpush1.bf16.msra.mxu0 0
        %614 = vmatprep.subr.bf16.mxu0 0
        %615 = vmatpush1.bf16.msra.mxu0 0
        %616 = vmatprep.subr.bf16.mxu0 0
        %617 = vmatpush1.bf16.msra.mxu0 0
        %618 = vmatprep.subr.bf16.mxu0 0
        %619 = vmatpush1.bf16.msra.mxu0 0
        %620 = vmatprep.subr.bf16.mxu0 0
        %621 = vmatpush1.bf16.msra.mxu0 0
        %622 = vmatprep.subr.bf16.mxu0 0
        %623 = vmatpush1.bf16.msra.mxu0 0
        %624 = vmatprep.subr.bf16.mxu0 0
        %625 = vmatpush1.bf16.msra.mxu0 0
        %626 = vmatprep.subr.bf16.mxu0 0
        %627 = vmatpush1.bf16.msra.mxu0 0
        %628 = vmatprep.subr.bf16.mxu0 0
        %629 = vmatpush1.bf16.msra.mxu0 0
        %630 = vmatprep.subr.bf16.mxu0 0
        %631 = vmatpush1.bf16.msra.mxu0 0
        %632 = vmatprep.mubr.bf16.mxu0 0
        %633 = vmatmul.mubr.bf16.gmra.mrb[0].mxu0 %v592
        %v634 = vpop.f32.mrb[0].mxu0
        %v635 = vadd.f32 0.0, %v634
        %v636 = vpop.f32.mrb[0].mxu0
        %v637 = vadd.f32 0.0, %v636
        %v638 = vpop.f32.mrb[0].mxu0
        %v639 = vpop.f32.mrb[0].mxu0
        %640 = vdwg.mxu0
        %v641 = vadd.f32 %v581, %v635
        %v642 = vadd.f32 %v583, %v637
        %v643 = vld [vmem:[%s4] sm:$0xff]
        %645 = vset.pattern.permute.xlu0 0
        %646 = vperm.xlu0 %645, %v643
        %v647 = vpop.permute.xlu0 %646
        %v649 = vadd.f32 %v641, %v647
        %v650 = vadd.f32 %v642, %v647
        %v651 = vmax.f32 %v649, 0.0
        %v652 = vmax.f32 %v650, 0.0
        %vm653 = vcmp.ge.s32.totalorder %v382, 1
        %vm654 = vcmp.ge.s32.totalorder %v383, 1
        %655 = vrot.lane.b32.xlu0 %v651, 1
        %v656 = vpop.permute.xlu0 %655
        %657 = vrot.lane.b32.xlu0 %v652, 1
        %v658 = vpop.permute.xlu0 %657
        %vm659 = vcmp.lt.s32.totalorder %v334, 1
        %v660 = vsel %vm659, %v656, %v658
        %v661 = vsel %vm659, %v658, %v656
        %v662 = vsel %vm653, 1, 0
        %v663 = vsel %vm654, 1, 0
        %vm664 = vcmp.eq.s32.totalorder %v662, 1
        %vm665 = vcmp.eq.s32.totalorder %v663, 1
        %v666 = vsel %vm664, %v661, 0.0
        %v667 = vsel %vm665, %v660, 0.0
        %vm668 = vcmp.le.s32.totalorder %v382, 14
        %vm669 = vcmp.le.s32.totalorder %v383, 14
        %670 = vrot.lane.b32.xlu0 %v651, 127
        %v671 = vpop.permute.xlu0 %670
        %672 = vrot.lane.b32.xlu0 %v652, 127
        %v673 = vpop.permute.xlu0 %672
        %vm674 = vcmp.lt.s32.totalorder %v334, 127
        %v675 = vsel %vm674, %v671, %v673
        %v676 = vsel %vm674, %v673, %v671
        %v677 = vsel %vm668, 1, 0
        %v678 = vsel %vm669, 1, 0
        %vm679 = vcmp.eq.s32.totalorder %v677, 1
        %vm680 = vcmp.eq.s32.totalorder %v678, 1
        %v681 = vsel %vm679, %v675, 0.0
        %v682 = vsel %vm680, %v676, 0.0
        %v683 = vld [vmem:[%s5] sm:$0xf]
        %v684 = vpack.c.bf16 %v666, %v666
        %v685 = vpack.c.bf16 %v667, %v667
        %s686 = scalar_lea.vmem %s5, 4
        %v687 = vld [vmem:[%s686] sm:$0xf]
        %v688 = vpack.c.bf16 %v651, %v651
        %v689 = vpack.c.bf16 %v652, %v652
        %v691 = vsel %vm396, %v687, 0
        %v694 = vsel %vm400, %v688, 0
        %v697 = vsel %vm400, %v689, 0
        %699 = vmatprep.subr.bf16.mxu0 %v697
        %700 = vmatpush1.bf16.msra.mxu0 %v694
        %701 = vmatprep.subr.bf16.mxu0 0
        %702 = vmatpush1.bf16.msra.mxu0 0
        %703 = vmatprep.subr.bf16.mxu0 0
        %704 = vmatpush1.bf16.msra.mxu0 0
        %705 = vmatprep.subr.bf16.mxu0 0
        %706 = vmatpush1.bf16.msra.mxu0 0
        %707 = vmatprep.subr.bf16.mxu0 0
        %708 = vmatpush1.bf16.msra.mxu0 0
        %709 = vmatprep.subr.bf16.mxu0 0
        %710 = vmatpush1.bf16.msra.mxu0 0
        %711 = vmatprep.subr.bf16.mxu0 0
        %712 = vmatpush1.bf16.msra.mxu0 0
        %713 = vmatprep.subr.bf16.mxu0 0
        %714 = vmatpush1.bf16.msra.mxu0 0
        %715 = vmatprep.subr.bf16.mxu0 0
        %716 = vmatpush1.bf16.msra.mxu0 0
        %717 = vmatprep.subr.bf16.mxu0 0
        %718 = vmatpush1.bf16.msra.mxu0 0
        %719 = vmatprep.subr.bf16.mxu0 0
        %720 = vmatpush1.bf16.msra.mxu0 0
        %721 = vmatprep.subr.bf16.mxu0 0
        %722 = vmatpush1.bf16.msra.mxu0 0
        %723 = vmatprep.subr.bf16.mxu0 0
        %724 = vmatpush1.bf16.msra.mxu0 0
        %725 = vmatprep.subr.bf16.mxu0 0
        %726 = vmatpush1.bf16.msra.mxu0 0
        %727 = vmatprep.subr.bf16.mxu0 0
        %728 = vmatpush1.bf16.msra.mxu0 0
        %729 = vmatprep.subr.bf16.mxu0 0
        %730 = vmatpush1.bf16.msra.mxu0 0
        %731 = vmatprep.mubr.bf16.mxu0 0
        %732 = vmatmul.mubr.bf16.gmra.mrb[0].mxu0 %v691
        %v733 = vpop.f32.mrb[0].mxu0
        %v734 = vadd.f32 0.0, %v733
        %v735 = vpop.f32.mrb[0].mxu0
        %v736 = vadd.f32 0.0, %v735
        %v737 = vpop.f32.mrb[0].mxu0
        %v738 = vpop.f32.mrb[0].mxu0
        %739 = vdwg.mxu0
        %v741 = vsel %vm396, %v683, 0
        %v744 = vsel %vm400, %v684, 0
        %v747 = vsel %vm400, %v685, 0
        %749 = vmatprep.subr.bf16.mxu0 %v747
        %750 = vmatpush1.bf16.msra.mxu0 %v744
        %751 = vmatprep.subr.bf16.mxu0 0
        %752 = vmatpush1.bf16.msra.mxu0 0
        %753 = vmatprep.subr.bf16.mxu0 0
        %754 = vmatpush1.bf16.msra.mxu0 0
        %755 = vmatprep.subr.bf16.mxu0 0
        %756 = vmatpush1.bf16.msra.mxu0 0
        %757 = vmatprep.subr.bf16.mxu0 0
        %758 = vmatpush1.bf16.msra.mxu0 0
        %759 = vmatprep.subr.bf16.mxu0 0
        %760 = vmatpush1.bf16.msra.mxu0 0
        %761 = vmatprep.subr.bf16.mxu0 0
        %762 = vmatpush1.bf16.msra.mxu0 0
        %763 = vmatprep.subr.bf16.mxu0 0
        %764 = vmatpush1.bf16.msra.mxu0 0
        %765 = vmatprep.subr.bf16.mxu0 0
        %766 = vmatpush1.bf16.msra.mxu0 0
        %767 = vmatprep.subr.bf16.mxu0 0
        %768 = vmatpush1.bf16.msra.mxu0 0
        %769 = vmatprep.subr.bf16.mxu0 0
        %770 = vmatpush1.bf16.msra.mxu0 0
        %771 = vmatprep.subr.bf16.mxu0 0
        %772 = vmatpush1.bf16.msra.mxu0 0
        %773 = vmatprep.subr.bf16.mxu0 0
        %774 = vmatpush1.bf16.msra.mxu0 0
        %775 = vmatprep.subr.bf16.mxu0 0
        %776 = vmatpush1.bf16.msra.mxu0 0
        %777 = vmatprep.subr.bf16.mxu0 0
        %778 = vmatpush1.bf16.msra.mxu0 0
        %779 = vmatprep.subr.bf16.mxu0 0
        %780 = vmatpush1.bf16.msra.mxu0 0
        %781 = vmatprep.mubr.bf16.mxu0 0
        %782 = vmatmul.mubr.bf16.gmra.mrb[0].mxu0 %v741
        %v783 = vpop.f32.mrb[0].mxu0
        %v784 = vadd.f32 %v734, %v783
        %v785 = vpop.f32.mrb[0].mxu0
        %v786 = vadd.f32 %v736, %v785
        %v787 = vpop.f32.mrb[0].mxu0
        %v788 = vpop.f32.mrb[0].mxu0
        %789 = vdwg.mxu0
        %s790 = scalar_lea.vmem %s5, 8
        %v791 = vld [vmem:[%s790] sm:$0xf]
        %v792 = vpack.c.bf16 %v681, %v681
        %v793 = vpack.c.bf16 %v682, %v682
        %v795 = vsel %vm396, %v791, 0
        %v798 = vsel %vm400, %v792, 0
        %v801 = vsel %vm400, %v793, 0
        %803 = vmatprep.subr.bf16.mxu0 %v801
        %804 = vmatpush1.bf16.msra.mxu0 %v798
        %805 = vmatprep.subr.bf16.mxu0 0
        %806 = vmatpush1.bf16.msra.mxu0 0
        %807 = vmatprep.subr.bf16.mxu0 0
        %808 = vmatpush1.bf16.msra.mxu0 0
        %809 = vmatprep.subr.bf16.mxu0 0
        %810 = vmatpush1.bf16.msra.mxu0 0
        %811 = vmatprep.subr.bf16.mxu0 0
        %812 = vmatpush1.bf16.msra.mxu0 0
        %813 = vmatprep.subr.bf16.mxu0 0
        %814 = vmatpush1.bf16.msra.mxu0 0
        %815 = vmatprep.subr.bf16.mxu0 0
        %816 = vmatpush1.bf16.msra.mxu0 0
        %817 = vmatprep.subr.bf16.mxu0 0
        %818 = vmatpush1.bf16.msra.mxu0 0
        %819 = vmatprep.subr.bf16.mxu0 0
        %820 = vmatpush1.bf16.msra.mxu0 0
        %821 = vmatprep.subr.bf16.mxu0 0
        %822 = vmatpush1.bf16.msra.mxu0 0
        %823 = vmatprep.subr.bf16.mxu0 0
        %824 = vmatpush1.bf16.msra.mxu0 0
        %825 = vmatprep.subr.bf16.mxu0 0
        %826 = vmatpush1.bf16.msra.mxu0 0
        %827 = vmatprep.subr.bf16.mxu0 0
        %828 = vmatpush1.bf16.msra.mxu0 0
        %829 = vmatprep.subr.bf16.mxu0 0
        %830 = vmatpush1.bf16.msra.mxu0 0
        %831 = vmatprep.subr.bf16.mxu0 0
        %832 = vmatpush1.bf16.msra.mxu0 0
        %833 = vmatprep.subr.bf16.mxu0 0
        %834 = vmatpush1.bf16.msra.mxu0 0
        %835 = vmatprep.mubr.bf16.mxu0 0
        %836 = vmatmul.mubr.bf16.gmra.mrb[0].mxu0 %v795
        %v837 = vpop.f32.mrb[0].mxu0
        %v838 = vadd.f32 0.0, %v837
        %v839 = vpop.f32.mrb[0].mxu0
        %v840 = vadd.f32 0.0, %v839
        %v841 = vpop.f32.mrb[0].mxu0
        %v842 = vpop.f32.mrb[0].mxu0
        %843 = vdwg.mxu0
        %v844 = vadd.f32 %v784, %v838
        %v845 = vadd.f32 %v786, %v840
        %v846 = vld [vmem:[%s6] sm:$0xff]
        %848 = vset.pattern.permute.xlu0 0
        %849 = vperm.xlu0 %848, %v846
        %v850 = vpop.permute.xlu0 %849
        %v852 = vadd.f32 %v844, %v850
        %v853 = vadd.f32 %v845, %v850
        %v854 = vmax.f32 %v852, 0.0
        %v855 = vmax.f32 %v853, 0.0
        %v856 = vld [vmem:[%s7] sm:$0xf]
        %v857 = vld [vmem:[%s7 + $0x4] sm:$0xf]
        %v858 = vpack.c.bf16 %v854, %v854
        %v859 = vpack.c.bf16 %v855, %v855
        %v860 = vld [vmem:[%s8] sm:$0xff]
        %v861 = vld [vmem:[%s8 + $0x8] sm:$0xff]
        %863 = vset.pattern.permute.xlu0 0
        %864 = vperm.xlu0 %863, %v860
        %v865 = vpop.permute.xlu0 %864
        %868 = vset.pattern.permute.xlu0 0
        %869 = vperm.xlu0 %868, %v861
        %v870 = vpop.permute.xlu0 %869
        %v874 = vunpack.c.l.b16 %v856
        %v875 = vunpack.c.l.b16 %v857
        %v876 = vpack.c.b16 %v875, %v874
        %v878 = vsel %vm396, %v876, 0
        %v881 = vsel %vm400, %v858, 0
        %v884 = vsel %vm400, %v859, 0
        %886 = vmatprep.subr.bf16.mxu0 %v884
        %887 = vmatpush1.bf16.msra.mxu0 %v881
        %888 = vmatprep.subr.bf16.mxu0 0
        %889 = vmatpush1.bf16.msra.mxu0 0
        %890 = vmatprep.subr.bf16.mxu0 0
        %891 = vmatpush1.bf16.msra.mxu0 0
        %892 = vmatprep.subr.bf16.mxu0 0
        %893 = vmatpush1.bf16.msra.mxu0 0
        %894 = vmatprep.subr.bf16.mxu0 0
        %895 = vmatpush1.bf16.msra.mxu0 0
        %896 = vmatprep.subr.bf16.mxu0 0
        %897 = vmatpush1.bf16.msra.mxu0 0
        %898 = vmatprep.subr.bf16.mxu0 0
        %899 = vmatpush1.bf16.msra.mxu0 0
        %900 = vmatprep.subr.bf16.mxu0 0
        %901 = vmatpush1.bf16.msra.mxu0 0
        %902 = vmatprep.subr.bf16.mxu0 0
        %903 = vmatpush1.bf16.msra.mxu0 0
        %904 = vmatprep.subr.bf16.mxu0 0
        %905 = vmatpush1.bf16.msra.mxu0 0
        %906 = vmatprep.subr.bf16.mxu0 0
        %907 = vmatpush1.bf16.msra.mxu0 0
        %908 = vmatprep.subr.bf16.mxu0 0
        %909 = vmatpush1.bf16.msra.mxu0 0
        %910 = vmatprep.subr.bf16.mxu0 0
        %911 = vmatpush1.bf16.msra.mxu0 0
        %912 = vmatprep.subr.bf16.mxu0 0
        %913 = vmatpush1.bf16.msra.mxu0 0
        %914 = vmatprep.subr.bf16.mxu0 0
        %915 = vmatpush1.bf16.msra.mxu0 0
        %916 = vmatprep.subr.bf16.mxu0 0
        %917 = vmatpush1.bf16.msra.mxu0 0
        %918 = vmatprep.mubr.bf16.mxu0 0
        %919 = vmatmul.mubr.bf16.gmra.mrb[0].mxu0 %v878
        %v920 = vpop.f32.mrb[0].mxu0
        %v921 = vadd.f32 %v865, %v920
        %v922 = vpop.f32.mrb[0].mxu0
        %v923 = vadd.f32 %v865, %v922
        %v924 = vpop.f32.mrb[0].mxu0
        %v925 = vadd.f32 %v870, %v924
        %v926 = vpop.f32.mrb[0].mxu0
        %v927 = vadd.f32 %v870, %v926
        %928 = vdwg.mxu0
        %929 = vst [vmem:[%s325] sm:$0xff] %v921
        %930 = vst [vmem:[%s325 + $0x8] sm:$0xff] %v923
        %931 = vst [vmem:[%s325 + $0x10] sm:$0xff] %v925
        %932 = vst [vmem:[%s325 + $0x18] sm:$0xff] %v927
        %s933 = sand.u32 %s225, 1
        %s934 = scalar_lea.sflag [#allocation3], %s933
        %s935 = sand.u32 %s225, 1
        %s936 = smul.addr %s935, 32
        %s937 = scalar_lea.vmem [#allocation2], %s936
        // Predicated region
        $region57: #{tpu_custom_call.1} parent=55 // pred_check
          %p938 = pneg %p235
        $region58: #{tpu_custom_call.1} parent=55 // pred_check_branch
          %940 = sbr.rel (%p938) target = $region60
        $region59: #{tpu_custom_call.1} parent=55 // pred_region
          %s942 = ssub.s32 512, 512
          %943 = vsyncadd %s934, %s942
          %s944 = smul.addr %s23, 4
          %s945 = smul.addr %s944, 128
          %s946 = scalar_lea.hbm %s9, %s945
          %s947 = sshll.u32 %s937, 4
          %s948 = int_to_ptr.vmem [resolvable:$true] %s947
          %953 = dma.vmem_to_hbm [thread:$0]  %s948, 512, %s946, %s934, 256, 256, 16
        $region60: #{tpu_custom_call.1} parent=55 // pred_fallthru
          _
      $region56: #{tpu_custom_call.1} parent=5 // pred_fallthru
        _
      %p954 = scmp.le.s32.totalorder 2, %s18
      // Predicated region
      $region61: #{tpu_custom_call.1} parent=5 // pred_check
        %p955 = pneg %p954
      $region62: #{tpu_custom_call.1} parent=5 // pred_check_branch
        %957 = sbr.rel (%p955) target = $region64
      $region63: #{tpu_custom_call.1} parent=5 // pred_region
        %s958 = ssub.s32 %s18, 2
        // Predicated region
        $region65: #{tpu_custom_call.1} parent=63 // pred_check
          %p959 = pneg %p241
        $region66: #{tpu_custom_call.1} parent=63 // pred_check_branch
          %961 = sbr.rel (%p959) target = $region68
        $region67: #{tpu_custom_call.1} parent=63 // pred_region
          %s962 = sand.u32 %s226, 1
          %s963 = scalar_lea.sflag [#allocation3], %s962
          %s964 = sand.u32 %s226, 1
          %s965 = smul.addr %s964, 32
          %s966 = scalar_lea.vmem [#allocation2], %s965
          %967 = dma.done %s963, 512
        $region68: #{tpu_custom_call.1} parent=63 // pred_fallthru
          _
      $region64: #{tpu_custom_call.1} parent=5 // pred_fallthru
        _
    $region6: #{tpu_custom_call.1} parent=1 // loop_footer
      %s22 = sadd.s32 1, %s18
    $region7: #{tpu_custom_call.1} parent=1 // loop_footer_branch
      %17 = sbr.rel target = $region3
    $region8: #{tpu_custom_call.1} parent=1 // loop_exit
      _
    %968 = vsyncpa [#allocation3], 1
    %s969 = scalar_lea.sflag [#allocation3], 1
    %970 = vsyncpa %s969, 1

</llo_original>
